<compile_context>
chip_gen: v7x
topology: tpu7x:2x2x1
jax: 0.10.0
libtpu: 0.0.40
codegen_flags: <defaults>
</compile_context>

<pallas_src>
import functools

import jax
import jax.numpy as jnp
import numpy as np
from jax import lax
from jax.experimental import pallas as pl
from jax.experimental.pallas import tpu as pltpu

FPAD = 64  # lane padding per half; packed [cos | sin] DFT matrix is (L, 2*FPAD) = (L, 128)


def _sum_all(m):
    """Full reduction to a (1, 1) tile via two single-axis keepdims reduces."""
    return jnp.sum(jnp.sum(m, axis=1, keepdims=True), axis=0, keepdims=True)


def _contrast_kernel(off_ref, x_ref, dft_ref, out_ref, seg_ref, *, ck, K, L, T, f_sel):
    # off_ref : (N,)        int32 segment offsets (SMEM, scalar prefetch)
    # x_ref   : (B*C, T)    row-major input signal (time along lanes)
    # dft_ref : (L, 2*FPAD) packed [cos | sin] band-restricted DFT matrix (/L)
    # out_ref : (8, 128)    row 0 lanes 0..2 = [loss, pos_loss, neg_loss]
    # seg_ref : (N, L)      VMEM scratch for gathered segments (segment-major)
    n = 2 * ck
    bc = n // K

    # ---- temporal-window gather via dynamic lane rotation (XLU) -----------
    # Static Python loop: only the rotation amount (from SMEM) is dynamic.
    x_full = x_ref[...]                                   # (B*C, T) — one vld
    t_c = jnp.int32(T)
    for src_row in range(bc):
        row = x_full[src_row:src_row + 1, :]              # (1, T) static slice
        for k in range(K):
            r = src_row * K + k
            o = off_ref[r]                                # dynamic scalar offset
            shift = lax.rem(t_c - o, t_c)                 # (-o) mod T, >= 0
            rolled = pltpu.roll(row, shift, axis=1)       # dynamic vrot (XLU)
            seg_ref[pl.ds(r, 1), :] = rolled[:, :L]       # 64-lane row store

    # NOTE: no mean subtraction — the selected band excludes the DC bin
    # (asserted in make_dft_matrix), so removing the mean is a no-op here.

    # ---- rFFT power in the selected band: single (n,L)x(L,128) MXU pass ----
    y = jnp.dot(seg_ref[...], dft_ref[...], preferred_element_type=jnp.float32)  # (n, 2*FPAD)
    sq = y * y
    # fold cos^2 + sin^2 with a static 64-lane rotation; zero the duplicate half
    psd = sq + pltpu.roll(sq, FPAD, axis=1)                               # (n, 2*FPAD)
    lane = lax.broadcasted_iota(jnp.int32, psd.shape, 1)
    psd = jnp.where(lane < FPAD, psd, 0.0)                                # data in lanes [0:f_sel)

    # normalized PSD within the band (padded columns are exactly 0)
    band_sum = jnp.sum(psd, axis=-1, keepdims=True)                       # (n, 1)
    psd_n = psd * pl.reciprocal(band_sum)                                 # (n, 2*FPAD)

    # ---- fused pairwise-MSE contrastive reduction --------------------------
    #   ||p_i - p_j||^2 = s_i + s_j - 2*G_ij.  Summed over the structured
    #   (same-video off-diagonal / cross-video) masks this collapses to
    #   closed-form multiples of S_all plus masked Gram sums; the (n, n)
    #   distance matrix is never materialized.  Keep all of this in f32.
    sq_norm = jnp.sum(psd_n * psd_n, axis=-1, keepdims=True)              # (n, 1)
    s_all = jnp.sum(sq_norm, axis=0, keepdims=True)                       # (1, 1)
    gram = lax.dot_general(psd_n, psd_n, (((1,), (1,)), ((), ())),
                           preferred_element_type=jnp.float32)            # (n, n)

    ii = lax.broadcasted_iota(jnp.int32, (n, n), 0)
    jj = lax.broadcasted_iota(jnp.int32, (n, n), 1)
    in0_i = ii < ck
    in0_j = jj < ck
    same_block = (in0_i & in0_j) | (jnp.logical_not(in0_i) & jnp.logical_not(in0_j))
    pos_mask = same_block & (ii != jj)
    cross_mask = in0_i & jnp.logical_not(in0_j)

    pos_gram = _sum_all(jnp.where(pos_mask, gram, 0.0))                   # (1, 1)
    cross_gram = _sum_all(jnp.where(cross_mask, gram, 0.0))               # (1, 1)

    inv_f = 1.0 / float(f_sel)
    # pos = average (over both videos) of mean off-diagonal MSE within a video
    pos_loss = (2.0 * (ck - 1) * s_all - 2.0 * pos_gram) * (
        inv_f / (2.0 * ck * (ck - 1)))
    # neg = -mean of cross-video MSEs
    neg_loss = -(float(ck) * s_all - 2.0 * cross_gram) * (inv_f / float(ck * ck))
    loss = pos_loss + neg_loss

    # ---- lane-dense (8, 128) scalar output: [loss, pos, neg] in row 0 ------
    r8 = lax.broadcasted_iota(jnp.int32, (8, 128), 0)
    c128 = lax.broadcasted_iota(jnp.int32, (8, 128), 1)
    out_ref[...] = jnp.where((r8 == 0) & (c128 == 0), loss,
                   jnp.where((r8 == 0) & (c128 == 1), pos_loss,
                   jnp.where((r8 == 0) & (c128 == 2), neg_loss, 0.0)))


def contrast_psd_loss(x_rows, offsets_flat, dft, *, ck, K, L, f_sel):
    """Single fused Pallas call: gather + band PSD + contrastive reduction."""
    BC, T = x_rows.shape
    n = 2 * ck
    kernel = functools.partial(_contrast_kernel, ck=ck, K=K, L=L, T=T, f_sel=f_sel)
    flops = 2 * n * L * (2 * FPAD) + 2 * n * n * (2 * FPAD)
    bytes_accessed = 4 * (x_rows.size + dft.size + 8 * 128 + offsets_flat.size)
    # Scaling guard: resident data is ~45 KiB (x 4 KiB, dft 32 KiB, scratch/out
    # a few KiB) — VMEM is a non-issue on v5e/v6e/v7x.  Only if C*K or delta_t
    # grow by orders of magnitude would the Gram need 128x128 output tiling.
    out = pl.pallas_call(
        kernel,
        out_shape=jax.ShapeDtypeStruct((8, 128), jnp.float32),
        grid_spec=pltpu.PrefetchScalarGridSpec(
            num_scalar_prefetch=1,
            grid=(1,),
            in_specs=[
                pl.BlockSpec((BC, T), lambda i, off: (0, 0)),
                pl.BlockSpec((L, 2 * FPAD), lambda i, off: (0, 0)),
            ],
            out_specs=pl.BlockSpec((8, 128), lambda i, off: (0, 0)),
            scratch_shapes=[pltpu.VMEM((n, L), jnp.float32)],
        ),
        compiler_params=pltpu.CompilerParams(dimension_semantics=("arbitrary",)),
        cost_estimate=pl.CostEstimate(
            flops=flops, transcendentals=0, bytes_accessed=bytes_accessed),
    )(offsets_flat, x_rows, dft)
    return out[0, 0], out[0, 1], out[0, 2]


def make_dft_matrix(delta_t, Fs, high_pass, low_pass, fpad=FPAD):
    """(delta_t, 2*fpad) matrix: cols [0:f_sel]=cos, [fpad:fpad+f_sel]=sin for
    the selected band, scaled 1/delta_t (rfft norm='forward'); zeros elsewhere."""
    n_bins = delta_t // 2 + 1
    freqs = np.linspace(0.0, Fs / 2.0, n_bins)
    use = np.logical_and(freqs >= high_pass / 60.0, freqs <= low_pass / 60.0)
    sel = np.nonzero(use)[0]
    f_sel = int(sel.shape[0])
    assert 0 < f_sel <= fpad
    # DC bin must be excluded for the in-kernel mean-subtraction elision to be
    # exact (integer-frequency bins of a constant vector are exactly zero).
    assert sel[0] > 0, "selected band must exclude the DC bin"
    nn = np.arange(delta_t)[:, None].astype(np.float64)
    kk = sel[None, :].astype(np.float64)
    ang = 2.0 * np.pi * nn * kk / float(delta_t)
    dft = np.zeros((delta_t, 2 * fpad), np.float32)
    dft[:, :f_sel] = (np.cos(ang) / delta_t).astype(np.float32)
    dft[:, fpad:fpad + f_sel] = (np.sin(ang) / delta_t).astype(np.float32)
    return jnp.asarray(dft), f_sel


def contrast_loss(x, offsets, dft, f_sel, delta_t, K):
    """Pallas-backed ContrastLoss.forward.  x: (2, C, T); offsets: (2, C, K)."""
    B, C, T = x.shape
    assert B == 2, "ContrastLoss forward assumes exactly 2 videos in the batch"
    ck = C * K
    x_rows = x.reshape(B * C, T).astype(jnp.float32)           # (B*C, T) row-major
    # clamp so a bad offset can never cause a silent OOB window in the kernel
    off = jnp.clip(offsets.reshape(2 * ck), 0, T - delta_t).astype(jnp.int32)
    return contrast_psd_loss(x_rows, off, dft, ck=ck, K=K, L=delta_t, f_sel=f_sel)


def reference_loss(x_np, off_np, delta_t, K, Fs, high_pass, low_pass):
    """Pure-numpy reference mirroring the PyTorch module (float64, np.fft)."""
    B, C, T = x_np.shape
    samples = [[] for _ in range(B)]
    for b in range(B):
        for c in range(C):
            for kk in range(K):
                o = int(off_np[b, c, kk])
                seg = x_np[b, c, o:o + delta_t].astype(np.float64)
                seg = seg - seg.mean()
                f = np.fft.rfft(seg) / delta_t               # norm='forward'
                psd = f.real ** 2 + f.imag ** 2
                freqs = np.linspace(0.0, Fs / 2.0, psd.shape[0])
                use = (freqs >= high_pass / 60.0) & (freqs <= low_pass / 60.0)
                p = psd[use]
                p = p / p.sum()
                samples[b].append(p)

    def cmp(la, lb, exclude_same):
        tot, M = 0.0, 0
        for i in range(len(la)):
            for j in range(len(lb)):
                if exclude_same and i == j:
                    continue
                tot += np.mean((la[i] - lb[j]) ** 2)
                M += 1
        return tot / M if M > 0 else 0.0

    pos = (cmp(samples[0], samples[0], True) + cmp(samples[1], samples[1], True)) / 2.0
    neg = -cmp(samples[0], samples[1], False)
    return pos + neg, pos, neg


if __name__ == "__main__":
    # config (ContrastLoss(delta_t, K, Fs))
    B, C, T = 2, 4, 128
    delta_t, K, Fs = 64, 2, 30.0
    high_pass, low_pass = 40.0, 180.0

    key = jax.random.PRNGKey(0)
    k_x, k_off = jax.random.split(key)
    x = jax.random.normal(k_x, (B, C, T), dtype=jnp.float32)
    # TODO(synk): STSampling's torch.randint offset draw stays host-side
    # (jax.random); the kernel consumes the offsets via scalar prefetch.
    offsets = jax.random.randint(k_off, (B, C, K), 0, T - delta_t + 1)

    dft, f_sel = make_dft_matrix(delta_t, Fs, high_pass, low_pass)

    fwd = jax.jit(functools.partial(
        contrast_loss, dft=dft, f_sel=f_sel, delta_t=delta_t, K=K))
    loss, pos_loss, neg_loss = fwd(x, offsets)
    jax.block_until_ready(loss)

    # correctness check against a pure-numpy reference
    ref_loss, ref_pos, ref_neg = reference_loss(
        np.asarray(x), np.asarray(offsets), delta_t, K, Fs, high_pass, low_pass)
    np.testing.assert_allclose(float(pos_loss), ref_pos, rtol=1e-3, atol=1e-5)
    np.testing.assert_allclose(float(neg_loss), ref_neg, rtol=1e-3, atol=1e-5)
    np.testing.assert_allclose(float(loss), ref_loss, rtol=1e-3, atol=1e-5)

    print("KERNEL_OK")
</pallas_src>

<mosaic_0001>
module attributes {stable_mosaic.version = 11 : i64} {
  func.func @_contrast_kernel(%arg0: i32, %arg1: memref<16xi32, #tpu.memory_space<smem>>, %arg2: memref<8x128xf32, #tpu.memory_space<vmem>>, %arg3: memref<64x128xf32, #tpu.memory_space<vmem>>, %arg4: memref<8x128xf32, #tpu.memory_space<vmem>>, %arg5: memref<16x64xf32, #tpu.memory_space<vmem>>) attributes {dimension_semantics = [#tpu.dimension_semantics<arbitrary>], iteration_bounds = array<i64: 1>, scalar_prefetch = 1 : i64, scratch_operands = 1 : i64, tpu.core_type = #tpu.core_type<tc>, window_params = [{pipeline_mode = #tpu.pipeline_mode<synchronous>, transform_indices = @transform_0, window_bounds = array<i64: 8, 128>}, {pipeline_mode = #tpu.pipeline_mode<synchronous>, transform_indices = @transform_1, window_bounds = array<i64: 64, 128>}, {pipeline_mode = #tpu.pipeline_mode<synchronous>, transform_indices = @transform_2, window_bounds = array<i64: 8, 128>}]} {
    %c0 = arith.constant 0 : index
    %c0_0 = arith.constant 0 : index
    %0 = vector.load %arg2[%c0, %c0_0] : memref<8x128xf32, #tpu.memory_space<vmem>>, vector<8x128xf32>
    %1 = vector.extract_strided_slice %0 {offsets = [0, 0], sizes = [1, 128], strides = [1, 1]} : vector<8x128xf32> to vector<1x128xf32>
    %c0_1 = arith.constant 0 : index
    %2 = memref.load %arg1[%c0_1] : memref<16xi32, #tpu.memory_space<smem>>
    %c128_i32 = arith.constant 128 : i32
    %3 = arith.subi %c128_i32, %2 : i32
    %c128_i32_2 = arith.constant 128 : i32
    %4 = arith.remsi %3, %c128_i32_2 : i32
    %5 = tpu.dynamic_rotate %1 by %4 dim 1 : vector<1x128xf32>, i32 -> vector<1x128xf32>
    %6 = vector.extract_strided_slice %5 {offsets = [0, 0], sizes = [1, 64], strides = [1, 1]} : vector<1x128xf32> to vector<1x64xf32>
    %c0_3 = arith.constant 0 : index
    %c0_4 = arith.constant 0 : index
    %7 = vector.load %arg5[%c0_3, %c0_4] : memref<16x64xf32, #tpu.memory_space<vmem>>, vector<1x64xf32>
    tpu.vector_store %arg5[%c0_3, %c0_4], %6 {strides = array<i32>} : memref<16x64xf32, #tpu.memory_space<vmem>>, vector<1x64xf32>,
    %c1 = arith.constant 1 : index
    %8 = memref.load %arg1[%c1] : memref<16xi32, #tpu.memory_space<smem>>
    %c128_i32_5 = arith.constant 128 : i32
    %9 = arith.subi %c128_i32_5, %8 : i32
    %c128_i32_6 = arith.constant 128 : i32
    %10 = arith.remsi %9, %c128_i32_6 : i32
    %11 = tpu.dynamic_rotate %1 by %10 dim 1 : vector<1x128xf32>, i32 -> vector<1x128xf32>
    %12 = vector.extract_strided_slice %11 {offsets = [0, 0], sizes = [1, 64], strides = [1, 1]} : vector<1x128xf32> to vector<1x64xf32>
    %c1_7 = arith.constant 1 : index
    %c0_8 = arith.constant 0 : index
    %13 = vector.load %arg5[%c1_7, %c0_8] : memref<16x64xf32, #tpu.memory_space<vmem>>, vector<1x64xf32>
    tpu.vector_store %arg5[%c1_7, %c0_8], %12 {strides = array<i32>} : memref<16x64xf32, #tpu.memory_space<vmem>>, vector<1x64xf32>,
    %14 = vector.extract_strided_slice %0 {offsets = [1, 0], sizes = [1, 128], strides = [1, 1]} : vector<8x128xf32> to vector<1x128xf32>
    %c2 = arith.constant 2 : index
    %15 = memref.load %arg1[%c2] : memref<16xi32, #tpu.memory_space<smem>>
    %c128_i32_9 = arith.constant 128 : i32
    %16 = arith.subi %c128_i32_9, %15 : i32
    %c128_i32_10 = arith.constant 128 : i32
    %17 = arith.remsi %16, %c128_i32_10 : i32
    %18 = tpu.dynamic_rotate %14 by %17 dim 1 : vector<1x128xf32>, i32 -> vector<1x128xf32>
    %19 = vector.extract_strided_slice %18 {offsets = [0, 0], sizes = [1, 64], strides = [1, 1]} : vector<1x128xf32> to vector<1x64xf32>
    %c2_11 = arith.constant 2 : index
    %c0_12 = arith.constant 0 : index
    %20 = vector.load %arg5[%c2_11, %c0_12] : memref<16x64xf32, #tpu.memory_space<vmem>>, vector<1x64xf32>
    tpu.vector_store %arg5[%c2_11, %c0_12], %19 {strides = array<i32>} : memref<16x64xf32, #tpu.memory_space<vmem>>, vector<1x64xf32>,
    %c3 = arith.constant 3 : index
    %21 = memref.load %arg1[%c3] : memref<16xi32, #tpu.memory_space<smem>>
    %c128_i32_13 = arith.constant 128 : i32
    %22 = arith.subi %c128_i32_13, %21 : i32
    %c128_i32_14 = arith.constant 128 : i32
    %23 = arith.remsi %22, %c128_i32_14 : i32
    %24 = tpu.dynamic_rotate %14 by %23 dim 1 : vector<1x128xf32>, i32 -> vector<1x128xf32>
    %25 = vector.extract_strided_slice %24 {offsets = [0, 0], sizes = [1, 64], strides = [1, 1]} : vector<1x128xf32> to vector<1x64xf32>
    %c3_15 = arith.constant 3 : index
    %c0_16 = arith.constant 0 : index
    %26 = vector.load %arg5[%c3_15, %c0_16] : memref<16x64xf32, #tpu.memory_space<vmem>>, vector<1x64xf32>
    tpu.vector_store %arg5[%c3_15, %c0_16], %25 {strides = array<i32>} : memref<16x64xf32, #tpu.memory_space<vmem>>, vector<1x64xf32>,
    %27 = vector.extract_strided_slice %0 {offsets = [2, 0], sizes = [1, 128], strides = [1, 1]} : vector<8x128xf32> to vector<1x128xf32>
    %c4 = arith.constant 4 : index
    %28 = memref.load %arg1[%c4] : memref<16xi32, #tpu.memory_space<smem>>
    %c128_i32_17 = arith.constant 128 : i32
    %29 = arith.subi %c128_i32_17, %28 : i32
    %c128_i32_18 = arith.constant 128 : i32
    %30 = arith.remsi %29, %c128_i32_18 : i32
    %31 = tpu.dynamic_rotate %27 by %30 dim 1 : vector<1x128xf32>, i32 -> vector<1x128xf32>
    %32 = vector.extract_strided_slice %31 {offsets = [0, 0], sizes = [1, 64], strides = [1, 1]} : vector<1x128xf32> to vector<1x64xf32>
    %c4_19 = arith.constant 4 : index
    %c0_20 = arith.constant 0 : index
    %33 = vector.load %arg5[%c4_19, %c0_20] : memref<16x64xf32, #tpu.memory_space<vmem>>, vector<1x64xf32>
    tpu.vector_store %arg5[%c4_19, %c0_20], %32 {strides = array<i32>} : memref<16x64xf32, #tpu.memory_space<vmem>>, vector<1x64xf32>,
    %c5 = arith.constant 5 : index
    %34 = memref.load %arg1[%c5] : memref<16xi32, #tpu.memory_space<smem>>
    %c128_i32_21 = arith.constant 128 : i32
    %35 = arith.subi %c128_i32_21, %34 : i32
    %c128_i32_22 = arith.constant 128 : i32
    %36 = arith.remsi %35, %c128_i32_22 : i32
    %37 = tpu.dynamic_rotate %27 by %36 dim 1 : vector<1x128xf32>, i32 -> vector<1x128xf32>
    %38 = vector.extract_strided_slice %37 {offsets = [0, 0], sizes = [1, 64], strides = [1, 1]} : vector<1x128xf32> to vector<1x64xf32>
    %c5_23 = arith.constant 5 : index
    %c0_24 = arith.constant 0 : index
    %39 = vector.load %arg5[%c5_23, %c0_24] : memref<16x64xf32, #tpu.memory_space<vmem>>, vector<1x64xf32>
    tpu.vector_store %arg5[%c5_23, %c0_24], %38 {strides = array<i32>} : memref<16x64xf32, #tpu.memory_space<vmem>>, vector<1x64xf32>,
    %40 = vector.extract_strided_slice %0 {offsets = [3, 0], sizes = [1, 128], strides = [1, 1]} : vector<8x128xf32> to vector<1x128xf32>
    %c6 = arith.constant 6 : index
    %41 = memref.load %arg1[%c6] : memref<16xi32, #tpu.memory_space<smem>>
    %c128_i32_25 = arith.constant 128 : i32
    %42 = arith.subi %c128_i32_25, %41 : i32
    %c128_i32_26 = arith.constant 128 : i32
    %43 = arith.remsi %42, %c128_i32_26 : i32
    %44 = tpu.dynamic_rotate %40 by %43 dim 1 : vector<1x128xf32>, i32 -> vector<1x128xf32>
    %45 = vector.extract_strided_slice %44 {offsets = [0, 0], sizes = [1, 64], strides = [1, 1]} : vector<1x128xf32> to vector<1x64xf32>
    %c6_27 = arith.constant 6 : index
    %c0_28 = arith.constant 0 : index
    %46 = vector.load %arg5[%c6_27, %c0_28] : memref<16x64xf32, #tpu.memory_space<vmem>>, vector<1x64xf32>
    tpu.vector_store %arg5[%c6_27, %c0_28], %45 {strides = array<i32>} : memref<16x64xf32, #tpu.memory_space<vmem>>, vector<1x64xf32>,
    %c7 = arith.constant 7 : index
    %47 = memref.load %arg1[%c7] : memref<16xi32, #tpu.memory_space<smem>>
    %c128_i32_29 = arith.constant 128 : i32
    %48 = arith.subi %c128_i32_29, %47 : i32
    %c128_i32_30 = arith.constant 128 : i32
    %49 = arith.remsi %48, %c128_i32_30 : i32
    %50 = tpu.dynamic_rotate %40 by %49 dim 1 : vector<1x128xf32>, i32 -> vector<1x128xf32>
    %51 = vector.extract_strided_slice %50 {offsets = [0, 0], sizes = [1, 64], strides = [1, 1]} : vector<1x128xf32> to vector<1x64xf32>
    %c7_31 = arith.constant 7 : index
    %c0_32 = arith.constant 0 : index
    %52 = vector.load %arg5[%c7_31, %c0_32] : memref<16x64xf32, #tpu.memory_space<vmem>>, vector<1x64xf32>
    tpu.vector_store %arg5[%c7_31, %c0_32], %51 {strides = array<i32>} : memref<16x64xf32, #tpu.memory_space<vmem>>, vector<1x64xf32>,
    %53 = vector.extract_strided_slice %0 {offsets = [4, 0], sizes = [1, 128], strides = [1, 1]} : vector<8x128xf32> to vector<1x128xf32>
    %c8 = arith.constant 8 : index
    %54 = memref.load %arg1[%c8] : memref<16xi32, #tpu.memory_space<smem>>
    %c128_i32_33 = arith.constant 128 : i32
    %55 = arith.subi %c128_i32_33, %54 : i32
    %c128_i32_34 = arith.constant 128 : i32
    %56 = arith.remsi %55, %c128_i32_34 : i32
    %57 = tpu.dynamic_rotate %53 by %56 dim 1 : vector<1x128xf32>, i32 -> vector<1x128xf32>
    %58 = vector.extract_strided_slice %57 {offsets = [0, 0], sizes = [1, 64], strides = [1, 1]} : vector<1x128xf32> to vector<1x64xf32>
    %c8_35 = arith.constant 8 : index
    %c0_36 = arith.constant 0 : index
    %59 = vector.load %arg5[%c8_35, %c0_36] : memref<16x64xf32, #tpu.memory_space<vmem>>, vector<1x64xf32>
    tpu.vector_store %arg5[%c8_35, %c0_36], %58 {strides = array<i32>} : memref<16x64xf32, #tpu.memory_space<vmem>>, vector<1x64xf32>,
    %c9 = arith.constant 9 : index
    %60 = memref.load %arg1[%c9] : memref<16xi32, #tpu.memory_space<smem>>
    %c128_i32_37 = arith.constant 128 : i32
    %61 = arith.subi %c128_i32_37, %60 : i32
    %c128_i32_38 = arith.constant 128 : i32
    %62 = arith.remsi %61, %c128_i32_38 : i32
    %63 = tpu.dynamic_rotate %53 by %62 dim 1 : vector<1x128xf32>, i32 -> vector<1x128xf32>
    %64 = vector.extract_strided_slice %63 {offsets = [0, 0], sizes = [1, 64], strides = [1, 1]} : vector<1x128xf32> to vector<1x64xf32>
    %c9_39 = arith.constant 9 : index
    %c0_40 = arith.constant 0 : index
    %65 = vector.load %arg5[%c9_39, %c0_40] : memref<16x64xf32, #tpu.memory_space<vmem>>, vector<1x64xf32>
    tpu.vector_store %arg5[%c9_39, %c0_40], %64 {strides = array<i32>} : memref<16x64xf32, #tpu.memory_space<vmem>>, vector<1x64xf32>,
    %66 = vector.extract_strided_slice %0 {offsets = [5, 0], sizes = [1, 128], strides = [1, 1]} : vector<8x128xf32> to vector<1x128xf32>
    %c10 = arith.constant 10 : index
    %67 = memref.load %arg1[%c10] : memref<16xi32, #tpu.memory_space<smem>>
    %c128_i32_41 = arith.constant 128 : i32
    %68 = arith.subi %c128_i32_41, %67 : i32
    %c128_i32_42 = arith.constant 128 : i32
    %69 = arith.remsi %68, %c128_i32_42 : i32
    %70 = tpu.dynamic_rotate %66 by %69 dim 1 : vector<1x128xf32>, i32 -> vector<1x128xf32>
    %71 = vector.extract_strided_slice %70 {offsets = [0, 0], sizes = [1, 64], strides = [1, 1]} : vector<1x128xf32> to vector<1x64xf32>
    %c10_43 = arith.constant 10 : index
    %c0_44 = arith.constant 0 : index
    %72 = vector.load %arg5[%c10_43, %c0_44] : memref<16x64xf32, #tpu.memory_space<vmem>>, vector<1x64xf32>
    tpu.vector_store %arg5[%c10_43, %c0_44], %71 {strides = array<i32>} : memref<16x64xf32, #tpu.memory_space<vmem>>, vector<1x64xf32>,
    %c11 = arith.constant 11 : index
    %73 = memref.load %arg1[%c11] : memref<16xi32, #tpu.memory_space<smem>>
    %c128_i32_45 = arith.constant 128 : i32
    %74 = arith.subi %c128_i32_45, %73 : i32
    %c128_i32_46 = arith.constant 128 : i32
    %75 = arith.remsi %74, %c128_i32_46 : i32
    %76 = tpu.dynamic_rotate %66 by %75 dim 1 : vector<1x128xf32>, i32 -> vector<1x128xf32>
    %77 = vector.extract_strided_slice %76 {offsets = [0, 0], sizes = [1, 64], strides = [1, 1]} : vector<1x128xf32> to vector<1x64xf32>
    %c11_47 = arith.constant 11 : index
    %c0_48 = arith.constant 0 : index
    %78 = vector.load %arg5[%c11_47, %c0_48] : memref<16x64xf32, #tpu.memory_space<vmem>>, vector<1x64xf32>
    tpu.vector_store %arg5[%c11_47, %c0_48], %77 {strides = array<i32>} : memref<16x64xf32, #tpu.memory_space<vmem>>, vector<1x64xf32>,
    %79 = vector.extract_strided_slice %0 {offsets = [6, 0], sizes = [1, 128], strides = [1, 1]} : vector<8x128xf32> to vector<1x128xf32>
    %c12 = arith.constant 12 : index
    %80 = memref.load %arg1[%c12] : memref<16xi32, #tpu.memory_space<smem>>
    %c128_i32_49 = arith.constant 128 : i32
    %81 = arith.subi %c128_i32_49, %80 : i32
    %c128_i32_50 = arith.constant 128 : i32
    %82 = arith.remsi %81, %c128_i32_50 : i32
    %83 = tpu.dynamic_rotate %79 by %82 dim 1 : vector<1x128xf32>, i32 -> vector<1x128xf32>
    %84 = vector.extract_strided_slice %83 {offsets = [0, 0], sizes = [1, 64], strides = [1, 1]} : vector<1x128xf32> to vector<1x64xf32>
    %c12_51 = arith.constant 12 : index
    %c0_52 = arith.constant 0 : index
    %85 = vector.load %arg5[%c12_51, %c0_52] : memref<16x64xf32, #tpu.memory_space<vmem>>, vector<1x64xf32>
    tpu.vector_store %arg5[%c12_51, %c0_52], %84 {strides = array<i32>} : memref<16x64xf32, #tpu.memory_space<vmem>>, vector<1x64xf32>,
    %c13 = arith.constant 13 : index
    %86 = memref.load %arg1[%c13] : memref<16xi32, #tpu.memory_space<smem>>
    %c128_i32_53 = arith.constant 128 : i32
    %87 = arith.subi %c128_i32_53, %86 : i32
    %c128_i32_54 = arith.constant 128 : i32
    %88 = arith.remsi %87, %c128_i32_54 : i32
    %89 = tpu.dynamic_rotate %79 by %88 dim 1 : vector<1x128xf32>, i32 -> vector<1x128xf32>
    %90 = vector.extract_strided_slice %89 {offsets = [0, 0], sizes = [1, 64], strides = [1, 1]} : vector<1x128xf32> to vector<1x64xf32>
    %c13_55 = arith.constant 13 : index
    %c0_56 = arith.constant 0 : index
    %91 = vector.load %arg5[%c13_55, %c0_56] : memref<16x64xf32, #tpu.memory_space<vmem>>, vector<1x64xf32>
    tpu.vector_store %arg5[%c13_55, %c0_56], %90 {strides = array<i32>} : memref<16x64xf32, #tpu.memory_space<vmem>>, vector<1x64xf32>,
    %92 = vector.extract_strided_slice %0 {offsets = [7, 0], sizes = [1, 128], strides = [1, 1]} : vector<8x128xf32> to vector<1x128xf32>
    %c14 = arith.constant 14 : index
    %93 = memref.load %arg1[%c14] : memref<16xi32, #tpu.memory_space<smem>>
    %c128_i32_57 = arith.constant 128 : i32
    %94 = arith.subi %c128_i32_57, %93 : i32
    %c128_i32_58 = arith.constant 128 : i32
    %95 = arith.remsi %94, %c128_i32_58 : i32
    %96 = tpu.dynamic_rotate %92 by %95 dim 1 : vector<1x128xf32>, i32 -> vector<1x128xf32>
    %97 = vector.extract_strided_slice %96 {offsets = [0, 0], sizes = [1, 64], strides = [1, 1]} : vector<1x128xf32> to vector<1x64xf32>
    %c14_59 = arith.constant 14 : index
    %c0_60 = arith.constant 0 : index
    %98 = vector.load %arg5[%c14_59, %c0_60] : memref<16x64xf32, #tpu.memory_space<vmem>>, vector<1x64xf32>
    tpu.vector_store %arg5[%c14_59, %c0_60], %97 {strides = array<i32>} : memref<16x64xf32, #tpu.memory_space<vmem>>, vector<1x64xf32>,
    %c15 = arith.constant 15 : index
    %99 = memref.load %arg1[%c15] : memref<16xi32, #tpu.memory_space<smem>>
    %c128_i32_61 = arith.constant 128 : i32
    %100 = arith.subi %c128_i32_61, %99 : i32
    %c128_i32_62 = arith.constant 128 : i32
    %101 = arith.remsi %100, %c128_i32_62 : i32
    %102 = tpu.dynamic_rotate %92 by %101 dim 1 : vector<1x128xf32>, i32 -> vector<1x128xf32>
    %103 = vector.extract_strided_slice %102 {offsets = [0, 0], sizes = [1, 64], strides = [1, 1]} : vector<1x128xf32> to vector<1x64xf32>
    %c15_63 = arith.constant 15 : index
    %c0_64 = arith.constant 0 : index
    %104 = vector.load %arg5[%c15_63, %c0_64] : memref<16x64xf32, #tpu.memory_space<vmem>>, vector<1x64xf32>
    tpu.vector_store %arg5[%c15_63, %c0_64], %103 {strides = array<i32>} : memref<16x64xf32, #tpu.memory_space<vmem>>, vector<1x64xf32>,
    %c0_65 = arith.constant 0 : index
    %c0_66 = arith.constant 0 : index
    %105 = vector.load %arg5[%c0_65, %c0_66] : memref<16x64xf32, #tpu.memory_space<vmem>>, vector<16x64xf32>
    %c0_67 = arith.constant 0 : index
    %c0_68 = arith.constant 0 : index
    %106 = vector.load %arg3[%c0_67, %c0_68] : memref<64x128xf32, #tpu.memory_space<vmem>>, vector<64x128xf32>
    %cst = arith.constant dense<0.000000e+00> : vector<16x128xf32>
    %107 = tpu.matmul %105, %106, %cst {dimension_numbers = #tpu.dot_dimension_numbers<[1], [0], [0], [1], [0, 0, 1, 1], [], []>} : vector<16x64xf32>, vector<64x128xf32>, vector<16x128xf32> -> vector<16x128xf32>
    %108 = arith.mulf %107, %107 : vector<16x128xf32>
    %c64_i32 = arith.constant 64 : i32
    %109 = tpu.dynamic_rotate %108 by %c64_i32 dim 1 : vector<16x128xf32>, i32 -> vector<16x128xf32>
    %110 = arith.addf %108, %109 : vector<16x128xf32>
    %111 = tpu.iota {dimensions = array<i32: 1>} : vector<16x128xi32>
    %c64_i32_69 = arith.constant 64 : i32
    %112 = vector.broadcast %c64_i32_69 : i32 to vector<16x128xi32>
    %113 = arith.cmpi slt, %111, %112 : vector<16x128xi32>
    %cst_70 = arith.constant 0.000000e+00 : f32
    %114 = vector.broadcast %cst_70 : f32 to vector<16x128xf32>
    %115 = arith.select %113, %110, %114 : vector<16x128xi1>, vector<16x128xf32>
    %cst_71 = arith.constant dense<0.000000e+00> : vector<16xf32>
    %116 = vector.multi_reduction <add>, %115, %cst_71 [1] : vector<16x128xf32> to vector<16xf32>
    %117 = vector.shape_cast %116 : vector<16xf32> to vector<16x1xf32>
    %118 = tpu.reciprocal %117 : vector<16x1xf32> -> vector<16x1xf32>
    %119 = vector.broadcast %118 : vector<16x1xf32> to vector<16x128xf32>
    %120 = arith.mulf %115, %119 : vector<16x128xf32>
    %121 = arith.mulf %120, %120 : vector<16x128xf32>
    %cst_72 = arith.constant dense<0.000000e+00> : vector<16xf32>
    %122 = vector.multi_reduction <add>, %121, %cst_72 [1] : vector<16x128xf32> to vector<16xf32>
    %123 = vector.shape_cast %122 : vector<16xf32> to vector<16x1xf32>
    %cst_73 = arith.constant dense<0.000000e+00> : vector<1xf32>
    %124 = vector.multi_reduction <add>, %123, %cst_73 [0] : vector<16x1xf32> to vector<1xf32>
    %125 = vector.shape_cast %124 : vector<1xf32> to vector<1x1xf32>
    %cst_74 = arith.constant dense<0.000000e+00> : vector<16x16xf32>
    %126 = tpu.matmul %120, %120, %cst_74 {dimension_numbers = #tpu.dot_dimension_numbers<[1], [1], [0], [0], [0, 0, 1, 0], [], []>} : vector<16x128xf32>, vector<16x128xf32>, vector<16x16xf32> -> vector<16x16xf32>
    %127 = tpu.iota {dimensions = array<i32: 0>} : vector<16x16xi32>
    %128 = tpu.iota {dimensions = array<i32: 1>} : vector<16x16xi32>
    %c8_i32 = arith.constant 8 : i32
    %129 = vector.broadcast %c8_i32 : i32 to vector<16x16xi32>
    %130 = arith.cmpi slt, %127, %129 : vector<16x16xi32>
    %c8_i32_75 = arith.constant 8 : i32
    %131 = vector.broadcast %c8_i32_75 : i32 to vector<16x16xi32>
    %132 = arith.cmpi slt, %128, %131 : vector<16x16xi32>
    %133 = arith.andi %130, %132 : vector<16x16xi1>
    %cst_76 = arith.constant dense<true> : vector<16x16xi1>
    %134 = arith.xori %130, %cst_76 : vector<16x16xi1>
    %cst_77 = arith.constant dense<true> : vector<16x16xi1>
    %135 = arith.xori %132, %cst_77 : vector<16x16xi1>
    %136 = arith.andi %134, %135 : vector<16x16xi1>
    %137 = arith.ori %133, %136 : vector<16x16xi1>
    %138 = arith.cmpi ne, %127, %128 : vector<16x16xi32>
    %139 = arith.andi %137, %138 : vector<16x16xi1>
    %cst_78 = arith.constant dense<true> : vector<16x16xi1>
    %140 = arith.xori %132, %cst_78 : vector<16x16xi1>
    %141 = arith.andi %130, %140 : vector<16x16xi1>
    %cst_79 = arith.constant 0.000000e+00 : f32
    %142 = vector.broadcast %cst_79 : f32 to vector<16x16xf32>
    %143 = arith.select %139, %126, %142 : vector<16x16xi1>, vector<16x16xf32>
    %cst_80 = arith.constant dense<0.000000e+00> : vector<16xf32>
    %144 = vector.multi_reduction <add>, %143, %cst_80 [1] : vector<16x16xf32> to vector<16xf32>
    %145 = vector.shape_cast %144 : vector<16xf32> to vector<16x1xf32>
    %cst_81 = arith.constant dense<0.000000e+00> : vector<1xf32>
    %146 = vector.multi_reduction <add>, %145, %cst_81 [0] : vector<16x1xf32> to vector<1xf32>
    %147 = vector.shape_cast %146 : vector<1xf32> to vector<1x1xf32>
    %cst_82 = arith.constant 0.000000e+00 : f32
    %148 = vector.broadcast %cst_82 : f32 to vector<16x16xf32>
    %149 = arith.select %141, %126, %148 : vector<16x16xi1>, vector<16x16xf32>
    %cst_83 = arith.constant dense<0.000000e+00> : vector<16xf32>
    %150 = vector.multi_reduction <add>, %149, %cst_83 [1] : vector<16x16xf32> to vector<16xf32>
    %151 = vector.shape_cast %150 : vector<16xf32> to vector<16x1xf32>
    %cst_84 = arith.constant dense<0.000000e+00> : vector<1xf32>
    %152 = vector.multi_reduction <add>, %151, %cst_84 [0] : vector<16x1xf32> to vector<1xf32>
    %153 = vector.shape_cast %152 : vector<1xf32> to vector<1x1xf32>
    %cst_85 = arith.constant 1.400000e+01 : f32
    %154 = vector.broadcast %cst_85 : f32 to vector<1x1xf32>
    %155 = arith.mulf %154, %125 : vector<1x1xf32>
    %cst_86 = arith.constant 2.000000e+00 : f32
    %156 = vector.broadcast %cst_86 : f32 to vector<1x1xf32>
    %157 = arith.mulf %156, %147 : vector<1x1xf32>
    %158 = arith.subf %155, %157 : vector<1x1xf32>
    %cst_87 = arith.constant 0.0017857143 : f32
    %159 = vector.broadcast %cst_87 : f32 to vector<1x1xf32>
    %160 = arith.mulf %158, %159 : vector<1x1xf32>
    %cst_88 = arith.constant 8.000000e+00 : f32
    %161 = vector.broadcast %cst_88 : f32 to vector<1x1xf32>
    %162 = arith.mulf %161, %125 : vector<1x1xf32>
    %cst_89 = arith.constant 2.000000e+00 : f32
    %163 = vector.broadcast %cst_89 : f32 to vector<1x1xf32>
    %164 = arith.mulf %163, %153 : vector<1x1xf32>
    %165 = arith.subf %162, %164 : vector<1x1xf32>
    %cst_90 = arith.constant 0.000000e+00 : f32
    %166 = vector.broadcast %cst_90 : f32 to vector<1x1xf32>
    %167 = arith.subf %166, %165 : vector<1x1xf32>
    %cst_91 = arith.constant 3.125000e-03 : f32
    %168 = vector.broadcast %cst_91 : f32 to vector<1x1xf32>
    %169 = arith.mulf %167, %168 : vector<1x1xf32>
    %170 = arith.addf %160, %169 : vector<1x1xf32>
    %171 = tpu.iota {dimensions = array<i32: 0>} : vector<8x128xi32>
    %172 = tpu.iota {dimensions = array<i32: 1>} : vector<8x128xi32>
    %c0_i32 = arith.constant 0 : i32
    %173 = vector.broadcast %c0_i32 : i32 to vector<8x128xi32>
    %174 = arith.cmpi eq, %171, %173 : vector<8x128xi32>
    %c0_i32_92 = arith.constant 0 : i32
    %175 = vector.broadcast %c0_i32_92 : i32 to vector<8x128xi32>
    %176 = arith.cmpi eq, %172, %175 : vector<8x128xi32>
    %177 = arith.andi %174, %176 : vector<8x128xi1>
    %c0_i32_93 = arith.constant 0 : i32
    %178 = vector.broadcast %c0_i32_93 : i32 to vector<8x128xi32>
    %179 = arith.cmpi eq, %171, %178 : vector<8x128xi32>
    %c1_i32 = arith.constant 1 : i32
    %180 = vector.broadcast %c1_i32 : i32 to vector<8x128xi32>
    %181 = arith.cmpi eq, %172, %180 : vector<8x128xi32>
    %182 = arith.andi %179, %181 : vector<8x128xi1>
    %c0_i32_94 = arith.constant 0 : i32
    %183 = vector.broadcast %c0_i32_94 : i32 to vector<8x128xi32>
    %184 = arith.cmpi eq, %171, %183 : vector<8x128xi32>
    %c2_i32 = arith.constant 2 : i32
    %185 = vector.broadcast %c2_i32 : i32 to vector<8x128xi32>
    %186 = arith.cmpi eq, %172, %185 : vector<8x128xi32>
    %187 = arith.andi %184, %186 : vector<8x128xi1>
    %cst_95 = arith.constant 0.000000e+00 : f32
    %188 = vector.shape_cast %169 : vector<1x1xf32> to vector<1x1xf32>
    %189 = vector.broadcast %188 : vector<1x1xf32> to vector<8x128xf32>
    %190 = vector.broadcast %cst_95 : f32 to vector<8x128xf32>
    %191 = arith.select %187, %189, %190 : vector<8x128xi1>, vector<8x128xf32>
    %192 = vector.shape_cast %160 : vector<1x1xf32> to vector<1x1xf32>
    %193 = vector.broadcast %192 : vector<1x1xf32> to vector<8x128xf32>
    %194 = arith.select %182, %193, %191 : vector<8x128xi1>, vector<8x128xf32>
    %195 = vector.shape_cast %170 : vector<1x1xf32> to vector<1x1xf32>
    %196 = vector.broadcast %195 : vector<1x1xf32> to vector<8x128xf32>
    %197 = arith.select %177, %196, %194 : vector<8x128xi1>, vector<8x128xf32>
    %c0_96 = arith.constant 0 : index
    %c0_97 = arith.constant 0 : index
    %198 = vector.load %arg4[%c0_96, %c0_97] : memref<8x128xf32, #tpu.memory_space<vmem>>, vector<8x128xf32>
    tpu.vector_store %arg4[%c0_96, %c0_97], %197 {strides = array<i32>} : memref<8x128xf32, #tpu.memory_space<vmem>>, vector<8x128xf32>,
    return
  }
  func.func @transform_0(%arg0: i32, %arg1: memref<16xi32, #tpu.memory_space<smem>>) -> (i32, i32) {
    %c0_i32 = arith.constant 0 : i32
    %c0_i32_0 = arith.constant 0 : i32
    %c0_i32_1 = arith.constant 0 : i32
    return %c0_i32, %c0_i32_0 : i32, i32
  }
  func.func @transform_1(%arg0: i32, %arg1: memref<16xi32, #tpu.memory_space<smem>>) -> (i32, i32) {
    %c0_i32 = arith.constant 0 : i32
    %c0_i32_0 = arith.constant 0 : i32
    %c0_i32_1 = arith.constant 0 : i32
    return %c0_i32, %c0_i32_0 : i32, i32
  }
  func.func @transform_2(%arg0: i32, %arg1: memref<16xi32, #tpu.memory_space<smem>>) -> (i32, i32) {
    %c0_i32 = arith.constant 0 : i32
    %c0_i32_0 = arith.constant 0 : i32
    %c0_i32_1 = arith.constant 0 : i32
    return %c0_i32, %c0_i32_0 : i32, i32
  }
}

</mosaic_0001>

<llo_original>
// kernel: contrast_loss.1
$region0: #{contrast_loss.1}
  #allocation0 [shape = 'u32[]', space=smem, size = 0x4, offset = 0x4, fixed_abs, tag = 'smem constant byte address 0x4 - core index']
  #allocation1 [shape = 'u32[144,128]{1,0:T(1,128)}', space=vmem, size = 0x12000, scoped, tag = 'internal scratch']
  #allocation2 [shape = 'f32[16,64]{1,0:T(8,128)}', space=vmem, size = 0x2000, scoped, tag = 'scratch operand']
  #allocation3 [shape = 's32[1]{0}', space=sflag, size = 0x4, scoped, tag = 'scoped memory for contrast_loss.1']
  #allocation4 [shape = 'u8[512]{0}', space=smem, size = 0x200, scoped, tag = 'prefetched SMEM operand 0']
  %s0 = inlined_call_operand.vmem [shape: s32[16], index: 0, kind: input, shape index: {}]
  %s1 = inlined_call_operand.vmem [shape: f32[8,128], index: 1, kind: input, shape index: {}]
  %s2 = inlined_call_operand.hbm [shape: f32[64,128], index: 2, kind: input, shape index: {}]
  %s3 = inlined_call_operand.vmem [shape: f32[8,128], index: 3, kind: output, shape index: {}]
  %s4 = sld [smem:[#allocation0]]
  $region22: #{contrast_loss.1} parent=0
    _
  %s6 = ssub.s32 1, %s4
  %s7 = scalar_select 0, %s6, %s4
  %s8 = sshll.u32 %s0, 4
  %s9 = int_to_ptr.vmem [resolvable:$true] %s8
  %11 = dma.vmem_to_smem %s9, 16, [#allocation4], [#allocation3]
  %12 = dma.done [#allocation3], 16
  %13 = sfence
  $region1: #{contrast_loss.1} parent=0
    #allocation5 [shape = 'u8[32768]{0}', space=vmem, size = 0x8000, scoped, tag = 'input window, operand 2, single buffered']
    #allocation6 [shape = 's32[1]{0}', space=sflag, size = 0x4, scoped, tag = 'scoped memory for contrast_loss.1']
    %14 = vsyncpa [#allocation6], 0
    // Predicated region
    $region2: #{contrast_loss.1} parent=1 // pred_check
      _
    $region3: #{contrast_loss.1} parent=1 // pred_check_branch
      %16 = sbr.rel (0) target = $region5
    $region4: #{contrast_loss.1} parent=1 // pred_region
      _
    $region5: #{contrast_loss.1} parent=1 // pred_fallthru
      _
    // Predicated region
    $region6: #{contrast_loss.1} parent=1 // pred_check
      _
    $region7: #{contrast_loss.1} parent=1 // pred_check_branch
      %18 = sbr.rel (0) target = $region9
    $region8: #{contrast_loss.1} parent=1 // pred_region
      %s20 = ssub.s32 1024, 1024
      %21 = vsyncadd [#allocation6], %s20
      %s22 = sshll.u32 [#allocation5], 4
      %s23 = int_to_ptr.vmem [resolvable:$true] %s22
      %28 = dma.hbm_to_vmem [thread:$0]  %s2, 1024, %s23, [#allocation6], 128, 128, 8
    $region9: #{contrast_loss.1} parent=1 // pred_fallthru
      _
    // Predicated region
    $region10: #{contrast_loss.1} parent=1 // pred_check
      _
    $region11: #{contrast_loss.1} parent=1 // pred_check_branch
      %30 = sbr.rel (0) target = $region13
    $region12: #{contrast_loss.1} parent=1 // pred_region
      %31 = dma.done [#allocation6], 1024
    $region13: #{contrast_loss.1} parent=1 // pred_fallthru
      _
    %v32 = vld [vmem:[%s1] sm:$0xff]
    %s33 = sld [smem:[#allocation4]]
    %s34 = ssub.s32 128, %s33
    %p35 = scmp.lt.s32.totalorder %s34, 0
    %s36 = ssub.s32 0, %s34
    %s37 = scalar_select %p35, %s36, %s34
    %s38 = sand.u32 %s37, 127
    %s39 = ssub.s32 0, %s38
    %s40 = scalar_select %p35, %s39, %s38
    %s41 = sand.u32 %s40, 127
    %s42 = sand.u32 %s41, 127
    %43 = vrot.lane.b32.xlu0 %v32, %s42
    %v44 = vpop.permute.xlu0 %43
    %vm45 = vcmask 516096
    %46 = vst.msk [vmem:[#allocation2] sm:$0x1] %vm45, %v44
    %s47 = sld [smem:[#allocation4 + $0x1]]
    %s48 = ssub.s32 128, %s47
    %p49 = scmp.lt.s32.totalorder %s48, 0
    %s50 = ssub.s32 0, %s48
    %s51 = scalar_select %p49, %s50, %s48
    %s52 = sand.u32 %s51, 127
    %s53 = ssub.s32 0, %s52
    %s54 = scalar_select %p49, %s53, %s52
    %s55 = sand.u32 %s54, 127
    %s56 = sand.u32 %s55, 127
    %57 = vrot.lane.b32.xlu0 %v32, %s56
    %v58 = vpop.permute.xlu0 %57
    %59 = vst.msk [vmem:[#allocation2 + $0x1] sm:$0x1] %vm45, %v58
    %s60 = sld [smem:[#allocation4 + $0x2]]
    %s61 = ssub.s32 128, %s60
    %p62 = scmp.lt.s32.totalorder %s61, 0
    %s63 = ssub.s32 0, %s61
    %s64 = scalar_select %p62, %s63, %s61
    %s65 = sand.u32 %s64, 127
    %s66 = ssub.s32 0, %s65
    %s67 = scalar_select %p62, %s66, %s65
    %v69 = vrot.slane %v32, 1
    %s71 = sand.u32 %s67, 127
    %s72 = sand.u32 %s71, 127
    %73 = vrot.lane.b32.xlu0 %v69, %s72
    %v74 = vpop.permute.xlu0 %73
    %75 = vst.msk [vmem:[#allocation2 + $0x2] sm:$0x1] %vm45, %v74
    %s76 = sld [smem:[#allocation4 + $0x3]]
    %s77 = ssub.s32 128, %s76
    %p78 = scmp.lt.s32.totalorder %s77, 0
    %s79 = ssub.s32 0, %s77
    %s80 = scalar_select %p78, %s79, %s77
    %s81 = sand.u32 %s80, 127
    %s82 = ssub.s32 0, %s81
    %s83 = scalar_select %p78, %s82, %s81
    %s84 = sand.u32 %s83, 127
    %s85 = sand.u32 %s84, 127
    %86 = vrot.lane.b32.xlu0 %v69, %s85
    %v87 = vpop.permute.xlu0 %86
    %88 = vst.msk [vmem:[#allocation2 + $0x3] sm:$0x1] %vm45, %v87
    %s89 = sld [smem:[#allocation4 + $0x4]]
    %s90 = ssub.s32 128, %s89
    %p91 = scmp.lt.s32.totalorder %s90, 0
    %s92 = ssub.s32 0, %s90
    %s93 = scalar_select %p91, %s92, %s90
    %s94 = sand.u32 %s93, 127
    %s95 = ssub.s32 0, %s94
    %s96 = scalar_select %p91, %s95, %s94
    %v97 = vrot.slane %v32, 2
    %s99 = sand.u32 %s96, 127
    %s100 = sand.u32 %s99, 127
    %101 = vrot.lane.b32.xlu0 %v97, %s100
    %v102 = vpop.permute.xlu0 %101
    %103 = vst.msk [vmem:[#allocation2 + $0x4] sm:$0x1] %vm45, %v102
    %s104 = sld [smem:[#allocation4 + $0x5]]
    %s105 = ssub.s32 128, %s104
    %p106 = scmp.lt.s32.totalorder %s105, 0
    %s107 = ssub.s32 0, %s105
    %s108 = scalar_select %p106, %s107, %s105
    %s109 = sand.u32 %s108, 127
    %s110 = ssub.s32 0, %s109
    %s111 = scalar_select %p106, %s110, %s109
    %s112 = sand.u32 %s111, 127
    %s113 = sand.u32 %s112, 127
    %114 = vrot.lane.b32.xlu0 %v97, %s113
    %v115 = vpop.permute.xlu0 %114
    %116 = vst.msk [vmem:[#allocation2 + $0x5] sm:$0x1] %vm45, %v115
    %s117 = sld [smem:[#allocation4 + $0x6]]
    %s118 = ssub.s32 128, %s117
    %p119 = scmp.lt.s32.totalorder %s118, 0
    %s120 = ssub.s32 0, %s118
    %s121 = scalar_select %p119, %s120, %s118
    %s122 = sand.u32 %s121, 127
    %s123 = ssub.s32 0, %s122
    %s124 = scalar_select %p119, %s123, %s122
    %v125 = vrot.slane %v32, 3
    %s127 = sand.u32 %s124, 127
    %s128 = sand.u32 %s127, 127
    %129 = vrot.lane.b32.xlu0 %v125, %s128
    %v130 = vpop.permute.xlu0 %129
    %131 = vst.msk [vmem:[#allocation2 + $0x6] sm:$0x1] %vm45, %v130
    %s132 = sld [smem:[#allocation4 + $0x7]]
    %s133 = ssub.s32 128, %s132
    %p134 = scmp.lt.s32.totalorder %s133, 0
    %s135 = ssub.s32 0, %s133
    %s136 = scalar_select %p134, %s135, %s133
    %s137 = sand.u32 %s136, 127
    %s138 = ssub.s32 0, %s137
    %s139 = scalar_select %p134, %s138, %s137
    %s140 = sand.u32 %s139, 127
    %s141 = sand.u32 %s140, 127
    %142 = vrot.lane.b32.xlu0 %v125, %s141
    %v143 = vpop.permute.xlu0 %142
    %144 = vst.msk [vmem:[#allocation2 + $0x7] sm:$0x1] %vm45, %v143
    %s145 = sld [smem:[#allocation4 + $0x8]]
    %s146 = ssub.s32 128, %s145
    %p147 = scmp.lt.s32.totalorder %s146, 0
    %s148 = ssub.s32 0, %s146
    %s149 = scalar_select %p147, %s148, %s146
    %s150 = sand.u32 %s149, 127
    %s151 = ssub.s32 0, %s150
    %s152 = scalar_select %p147, %s151, %s150
    %v153 = vrot.slane %v32, 4
    %s155 = sand.u32 %s152, 127
    %s156 = sand.u32 %s155, 127
    %157 = vrot.lane.b32.xlu0 %v153, %s156
    %v158 = vpop.permute.xlu0 %157
    %159 = vst.msk [vmem:[#allocation2 + $0x8] sm:$0x1] %vm45, %v158
    %s160 = sld [smem:[#allocation4 + $0x9]]
    %s161 = ssub.s32 128, %s160
    %p162 = scmp.lt.s32.totalorder %s161, 0
    %s163 = ssub.s32 0, %s161
    %s164 = scalar_select %p162, %s163, %s161
    %s165 = sand.u32 %s164, 127
    %s166 = ssub.s32 0, %s165
    %s167 = scalar_select %p162, %s166, %s165
    %s168 = sand.u32 %s167, 127
    %s169 = sand.u32 %s168, 127
    %170 = vrot.lane.b32.xlu0 %v153, %s169
    %v171 = vpop.permute.xlu0 %170
    %172 = vst.msk [vmem:[#allocation2 + $0x9] sm:$0x1] %vm45, %v171
    %s173 = sld [smem:[#allocation4 + $0xa]]
    %s174 = ssub.s32 128, %s173
    %p175 = scmp.lt.s32.totalorder %s174, 0
    %s176 = ssub.s32 0, %s174
    %s177 = scalar_select %p175, %s176, %s174
    %s178 = sand.u32 %s177, 127
    %s179 = ssub.s32 0, %s178
    %s180 = scalar_select %p175, %s179, %s178
    %v181 = vrot.slane %v32, 5
    %s183 = sand.u32 %s180, 127
    %s184 = sand.u32 %s183, 127
    %185 = vrot.lane.b32.xlu0 %v181, %s184
    %v186 = vpop.permute.xlu0 %185
    %187 = vst.msk [vmem:[#allocation2 + $0xa] sm:$0x1] %vm45, %v186
    %s188 = sld [smem:[#allocation4 + $0xb]]
    %s189 = ssub.s32 128, %s188
    %p190 = scmp.lt.s32.totalorder %s189, 0
    %s191 = ssub.s32 0, %s189
    %s192 = scalar_select %p190, %s191, %s189
    %s193 = sand.u32 %s192, 127
    %s194 = ssub.s32 0, %s193
    %s195 = scalar_select %p190, %s194, %s193
    %s196 = sand.u32 %s195, 127
    %s197 = sand.u32 %s196, 127
    %198 = vrot.lane.b32.xlu0 %v181, %s197
    %v199 = vpop.permute.xlu0 %198
    %200 = vst.msk [vmem:[#allocation2 + $0xb] sm:$0x1] %vm45, %v199
    %s201 = sld [smem:[#allocation4 + $0xc]]
    %s202 = ssub.s32 128, %s201
    %p203 = scmp.lt.s32.totalorder %s202, 0
    %s204 = ssub.s32 0, %s202
    %s205 = scalar_select %p203, %s204, %s202
    %s206 = sand.u32 %s205, 127
    %s207 = ssub.s32 0, %s206
    %s208 = scalar_select %p203, %s207, %s206
    %v209 = vrot.slane %v32, 6
    %s211 = sand.u32 %s208, 127
    %s212 = sand.u32 %s211, 127
    %213 = vrot.lane.b32.xlu0 %v209, %s212
    %v214 = vpop.permute.xlu0 %213
    %215 = vst.msk [vmem:[#allocation2 + $0xc] sm:$0x1] %vm45, %v214
    %s216 = sld [smem:[#allocation4 + $0xd]]
    %s217 = ssub.s32 128, %s216
    %p218 = scmp.lt.s32.totalorder %s217, 0
    %s219 = ssub.s32 0, %s217
    %s220 = scalar_select %p218, %s219, %s217
    %s221 = sand.u32 %s220, 127
    %s222 = ssub.s32 0, %s221
    %s223 = scalar_select %p218, %s222, %s221
    %s224 = sand.u32 %s223, 127
    %s225 = sand.u32 %s224, 127
    %226 = vrot.lane.b32.xlu0 %v209, %s225
    %v227 = vpop.permute.xlu0 %226
    %228 = vst.msk [vmem:[#allocation2 + $0xd] sm:$0x1] %vm45, %v227
    %s229 = sld [smem:[#allocation4 + $0xe]]
    %s230 = ssub.s32 128, %s229
    %p231 = scmp.lt.s32.totalorder %s230, 0
    %s232 = ssub.s32 0, %s230
    %s233 = scalar_select %p231, %s232, %s230
    %s234 = sand.u32 %s233, 127
    %s235 = ssub.s32 0, %s234
    %s236 = scalar_select %p231, %s235, %s234
    %v237 = vrot.slane %v32, 7
    %s239 = sand.u32 %s236, 127
    %s240 = sand.u32 %s239, 127
    %241 = vrot.lane.b32.xlu0 %v237, %s240
    %v242 = vpop.permute.xlu0 %241
    %243 = vst.msk [vmem:[#allocation2 + $0xe] sm:$0x1] %vm45, %v242
    %s244 = sld [smem:[#allocation4 + $0xf]]
    %s245 = ssub.s32 128, %s244
    %p246 = scmp.lt.s32.totalorder %s245, 0
    %s247 = ssub.s32 0, %s245
    %s248 = scalar_select %p246, %s247, %s245
    %s249 = sand.u32 %s248, 127
    %s250 = ssub.s32 0, %s249
    %s251 = scalar_select %p246, %s250, %s249
    %s252 = sand.u32 %s251, 127
    %s253 = sand.u32 %s252, 127
    %254 = vrot.lane.b32.xlu0 %v237, %s253
    %v255 = vpop.permute.xlu0 %254
    %256 = vst.msk [vmem:[#allocation2 + $0xf] sm:$0x1] %vm45, %v255
    %v257 = vld [vmem:[#allocation2] sm:$0xff]
    %v258 = vld [vmem:[#allocation2 + $0x8] sm:$0xff]
    %v259 = vld [vmem:[#allocation5] sm:$0xff]
    %v260 = vld [vmem:[#allocation5 + $0x8] sm:$0xff]
    %v261 = vld [vmem:[#allocation5 + $0x10] sm:$0xff]
    %v262 = vld [vmem:[#allocation5 + $0x18] sm:$0xff]
    %v263 = vld [vmem:[#allocation5 + $0x20] sm:$0xff]
    %v264 = vld [vmem:[#allocation5 + $0x28] sm:$0xff]
    %v265 = vld [vmem:[#allocation5 + $0x30] sm:$0xff]
    %v266 = vld [vmem:[#allocation5 + $0x38] sm:$0xff]
    %vm267 = vcmask 523264
    %v269 = vsel %vm267, %v257, 0
    %v272 = vsel %vm267, %v258, 0
    %274 = vmatprep.subr.mxu0 0.0
    %275 = vmatpush1.msra.mxu0 %v259
    %276 = vmatprep.subr.mxu0 0.0
    %277 = vmatpush1.msra.mxu0 %v260
    %278 = vmatprep.subr.mxu0 0.0
    %279 = vmatpush1.msra.mxu0 %v261
    %280 = vmatprep.subr.mxu0 0.0
    %281 = vmatpush1.msra.mxu0 %v262
    %282 = vmatprep.subr.mxu0 0.0
    %283 = vmatpush1.msra.mxu0 %v263
    %284 = vmatprep.subr.mxu0 0.0
    %285 = vmatpush1.msra.mxu0 %v264
    %286 = vmatprep.subr.mxu0 0.0
    %287 = vmatpush1.msra.mxu0 %v265
    %288 = vmatprep.subr.mxu0 0.0
    %289 = vmatpush1.msra.mxu0 %v266
    %290 = vmatprep.subr.mxu0 0.0
    %291 = vmatpush1.msra.mxu0 0.0
    %292 = vmatprep.subr.mxu0 0.0
    %293 = vmatpush1.msra.mxu0 0.0
    %294 = vmatprep.subr.mxu0 0.0
    %295 = vmatpush1.msra.mxu0 0.0
    %296 = vmatprep.subr.mxu0 0.0
    %297 = vmatpush1.msra.mxu0 0.0
    %298 = vmatprep.subr.mxu0 0.0
    %299 = vmatpush1.msra.mxu0 0.0
    %300 = vmatprep.subr.mxu0 0.0
    %301 = vmatpush1.msra.mxu0 0.0
    %302 = vmatprep.subr.mxu0 0.0
    %303 = vmatpush1.msra.mxu0 0.0
    %304 = vmatprep.subr.mxu0 0.0
    %305 = vmatpush1.msra.mxu0 0.0
    %306 = vmatprep.subr.mxu0 0.0
    %307 = vmatpush1.msra.mxu0 0.0
    %308 = vmatprep.subr.mxu0 0.0
    %309 = vmatpush1.msra.mxu0 0.0
    %310 = vmatprep.subr.mxu0 0.0
    %311 = vmatpush1.msra.mxu0 0.0
    %312 = vmatprep.subr.mxu0 0.0
    %313 = vmatpush1.msra.mxu0 0.0
    %314 = vmatprep.subr.mxu0 0.0
    %315 = vmatpush1.msra.mxu0 0.0
    %316 = vmatprep.subr.mxu0 0.0
    %317 = vmatpush1.msra.mxu0 0.0
    %318 = vmatprep.subr.mxu0 0.0
    %319 = vmatpush1.msra.mxu0 0.0
    %320 = vmatprep.subr.mxu0 0.0
    %321 = vmatpush1.msra.mxu0 0.0
    %322 = vmatprep.subr.mxu0 0.0
    %323 = vmatpush1.msra.mxu0 0.0
    %324 = vmatprep.subr.mxu0 0.0
    %325 = vmatpush1.msra.mxu0 0.0
    %326 = vmatprep.subr.mxu0 0.0
    %327 = vmatpush1.msra.mxu0 0.0
    %328 = vmatprep.subr.mxu0 0.0
    %329 = vmatpush1.msra.mxu0 0.0
    %330 = vmatprep.subr.mxu0 0.0
    %331 = vmatpush1.msra.mxu0 0.0
    %332 = vmatprep.subr.mxu0 0.0
    %333 = vmatpush1.msra.mxu0 0.0
    %334 = vmatprep.subr.mxu0 0.0
    %335 = vmatpush1.msra.mxu0 0.0
    %336 = vmatprep.subr.mxu0 0.0
    %337 = vmatpush1.msra.mxu0 0.0
    %338 = vmatprep.mubr.f32.mxu0 0.0
    %339 = vmatmul.mubr.f32.gmra.mrb[0].mxu0 %v269
    %v340 = vpop.f32.mrb[0].mxu0
    %v341 = vadd.f32 0.0, %v340
    %v342 = vpop.f32.mrb[0].mxu0
    %343 = vmatprep.mubr.f32.mxu0 0.0
    %344 = vmatmul.mubr.f32.gmra.mrb[0].mxu0 %v272
    %v345 = vpop.f32.mrb[0].mxu0
    %v346 = vadd.f32 0.0, %v345
    %v347 = vpop.f32.mrb[0].mxu0
    %348 = vdwg.mxu0
    %v349 = vmul.f32 %v341, %v341
    %v350 = vmul.f32 %v346, %v346
    %351 = vrot.lane.b32.xlu0 %v349, 64
    %v352 = vpop.permute.xlu0 %351
    %353 = vrot.lane.b32.xlu0 %v350, 64
    %v354 = vpop.permute.xlu0 %353
    %v355 = vadd.f32 %v349, %v352
    %v356 = vadd.f32 %v350, %v354
    %v357 = vlaneseq
    %v358 = vand.u32 %v357, 127
    %vm359 = vcmp.lt.s32.totalorder %v358, 64
    %v360 = vsel %vm359, %v355, 0.0
    %v361 = vsel %vm359, %v356, 0.0
    %362 = vadd.xlane.f32.xlu0 %v360
    %v363 = vpop.xlane.xlu0 %362
    %364 = vadd.xlane.f32.xlu0 %v361
    %v365 = vpop.xlane.xlu0 %364
    %v366 = vrcp.pop %v363
    %v367 = vrcp.pop %v365
    %v368 = vmul.f32 %v360, %v366
    %v369 = vmul.f32 %v361, %v367
    %v370 = vmul.f32 %v368, %v368
    %v371 = vmul.f32 %v369, %v369
    %372 = vadd.xlane.f32.xlu0 %v370
    %v373 = vpop.xlane.xlu0 %372
    %374 = vadd.xlane.f32.xlu0 %v371
    %v375 = vpop.xlane.xlu0 %374
    %v376 = vadd.f32 %v373, %v375
    %v377 = vrot.slane %v376, 4
    %v378 = vadd.f32 %v376, %v377
    %v379 = vrot.slane %v378, 2
    %v380 = vadd.f32 %v378, %v379
    %v381 = vrot.slane %v380, 1
    %v382 = vadd.f32 %v380, %v381
    %383 = vmatprep.subr.mxu0 0.0
    %384 = vmatpush1.xpose.msra.mxu0 %v368
    %385 = vmatprep.subr.mxu0 0.0
    %386 = vmatpush1.xpose.msra.mxu0 %v369
    %387 = vmatprep.subr.mxu0 0.0
    %388 = vmatpush1.xpose.msra.mxu0 0.0
    %389 = vmatprep.subr.mxu0 0.0
    %390 = vmatpush1.xpose.msra.mxu0 0.0
    %391 = vmatprep.subr.mxu0 0.0
    %392 = vmatpush1.xpose.msra.mxu0 0.0
    %393 = vmatprep.subr.mxu0 0.0
    %394 = vmatpush1.xpose.msra.mxu0 0.0
    %395 = vmatprep.subr.mxu0 0.0
    %396 = vmatpush1.xpose.msra.mxu0 0.0
    %397 = vmatprep.subr.mxu0 0.0
    %398 = vmatpush1.xpose.msra.mxu0 0.0
    %399 = vmatprep.subr.mxu0 0.0
    %400 = vmatpush1.xpose.msra.mxu0 0.0
    %401 = vmatprep.subr.mxu0 0.0
    %402 = vmatpush1.xpose.msra.mxu0 0.0
    %403 = vmatprep.subr.mxu0 0.0
    %404 = vmatpush1.xpose.msra.mxu0 0.0
    %405 = vmatprep.subr.mxu0 0.0
    %406 = vmatpush1.xpose.msra.mxu0 0.0
    %407 = vmatprep.subr.mxu0 0.0
    %408 = vmatpush1.xpose.msra.mxu0 0.0
    %409 = vmatprep.subr.mxu0 0.0
    %410 = vmatpush1.xpose.msra.mxu0 0.0
    %411 = vmatprep.subr.mxu0 0.0
    %412 = vmatpush1.xpose.msra.mxu0 0.0
    %413 = vmatprep.subr.mxu0 0.0
    %414 = vmatpush1.xpose.msra.mxu0 0.0
    %415 = vmatprep.subr.mxu0 0.0
    %416 = vmatpush1.xpose.msra.mxu0 0.0
    %417 = vmatprep.subr.mxu0 0.0
    %418 = vmatpush1.xpose.msra.mxu0 0.0
    %419 = vmatprep.subr.mxu0 0.0
    %420 = vmatpush1.xpose.msra.mxu0 0.0
    %421 = vmatprep.subr.mxu0 0.0
    %422 = vmatpush1.xpose.msra.mxu0 0.0
    %423 = vmatprep.subr.mxu0 0.0
    %424 = vmatpush1.xpose.msra.mxu0 0.0
    %425 = vmatprep.subr.mxu0 0.0
    %426 = vmatpush1.xpose.msra.mxu0 0.0
    %427 = vmatprep.subr.mxu0 0.0
    %428 = vmatpush1.xpose.msra.mxu0 0.0
    %429 = vmatprep.subr.mxu0 0.0
    %430 = vmatpush1.xpose.msra.mxu0 0.0
    %431 = vmatprep.subr.mxu0 0.0
    %432 = vmatpush1.xpose.msra.mxu0 0.0
    %433 = vmatprep.subr.mxu0 0.0
    %434 = vmatpush1.xpose.msra.mxu0 0.0
    %435 = vmatprep.subr.mxu0 0.0
    %436 = vmatpush1.xpose.msra.mxu0 0.0
    %437 = vmatprep.subr.mxu0 0.0
    %438 = vmatpush1.xpose.msra.mxu0 0.0
    %439 = vmatprep.subr.mxu0 0.0
    %440 = vmatpush1.xpose.msra.mxu0 0.0
    %441 = vmatprep.subr.mxu0 0.0
    %442 = vmatpush1.xpose.msra.mxu0 0.0
    %443 = vmatprep.subr.mxu0 0.0
    %444 = vmatpush1.xpose.msra.mxu0 0.0
    %445 = vmatprep.subr.mxu0 0.0
    %446 = vmatpush1.xpose.msra.mxu0 0.0
    %447 = vmatprep.mubr.f32.mxu0 0.0
    %448 = vmatmul.mubr.f32.gmra.mrb[0].mxu0 %v368
    %v449 = vpop.f32.mrb[0].mxu0
    %v450 = vadd.f32 0.0, %v449
    %v451 = vpop.f32.mrb[0].mxu0
    %452 = vmatprep.mubr.f32.mxu0 0.0
    %453 = vmatmul.mubr.f32.gmra.mrb[0].mxu0 %v369
    %v454 = vpop.f32.mrb[0].mxu0
    %v455 = vadd.f32 0.0, %v454
    %v456 = vpop.f32.mrb[0].mxu0
    %457 = vdwg.mxu0
    %v458 = vlaneseq
    %v459 = vshrl.u32 %v458, 7
    %v460 = vadd.s32 %v459, 8
    %vm461 = vcmp.lt.s32.totalorder %v459, 8
    %vm462 = vcmp.lt.s32.totalorder %v460, 8
    %vm463 = vcmp.lt.s32.totalorder %v358, 8
    %vm464 = vmand %vm461, %vm463
    %vm465 = vmand %vm462, %vm463
    %vm466 = vmxor %vm461, 1
    %vm467 = vmxor %vm462, 1
    %vm468 = vmxor %vm463, 1
    %vm469 = vmand %vm466, %vm468
    %vm470 = vmand %vm467, %vm468
    %vm471 = vmor %vm464, %vm469
    %vm472 = vmor %vm465, %vm470
    %vm473 = vcmp.ne.s32.totalorder %v459, %v358
    %vm474 = vcmp.ne.s32.totalorder %v460, %v358
    %vm475 = vmand %vm471, %vm473
    %vm476 = vmand %vm472, %vm474
    %vm477 = vmand %vm461, %vm468
    %vm478 = vmand %vm462, %vm468
    %v479 = vsel %vm475, %v450, 0.0
    %v480 = vsel %vm476, %v455, 0.0
    %vm481 = vcmask 130048
    %v482 = vsel %vm481, %v479, 0.0
    %483 = vadd.xlane.f32.xlu0 %v482
    %v484 = vpop.xlane.xlu0 %483
    %v485 = vsel %vm481, %v480, 0.0
    %486 = vadd.xlane.f32.xlu0 %v485
    %v487 = vpop.xlane.xlu0 %486
    %v488 = vadd.f32 %v484, %v487
    %v489 = vrot.slane %v488, 4
    %v490 = vadd.f32 %v488, %v489
    %v491 = vrot.slane %v490, 2
    %v492 = vadd.f32 %v490, %v491
    %v493 = vrot.slane %v492, 1
    %v494 = vadd.f32 %v492, %v493
    %v495 = vsel %vm477, %v450, 0.0
    %v496 = vsel %vm478, %v455, 0.0
    %v497 = vsel %vm481, %v495, 0.0
    %498 = vadd.xlane.f32.xlu0 %v497
    %v499 = vpop.xlane.xlu0 %498
    %v500 = vsel %vm481, %v496, 0.0
    %501 = vadd.xlane.f32.xlu0 %v500
    %v502 = vpop.xlane.xlu0 %501
    %v503 = vadd.f32 %v499, %v502
    %v504 = vrot.slane %v503, 4
    %v505 = vadd.f32 %v503, %v504
    %v506 = vrot.slane %v505, 2
    %v507 = vadd.f32 %v505, %v506
    %v508 = vrot.slane %v507, 1
    %v509 = vadd.f32 %v507, %v508
    %v510 = vmul.f32 %v382, 14.0
    %v511 = vmul.f32 %v494, 2.0
    %v512 = vsub.f32 %v510, %v511
    %v513 = vmul.f32 %v512, 0.0017857143
    %v514 = vmul.f32 %v382, 8.0
    %v515 = vmul.f32 %v509, 2.0
    %v516 = vsub.f32 %v514, %v515
    %v517 = vsub.f32 0.0, %v516
    %v518 = vmul.f32 %v517, 0.003125
    %v519 = vadd.f32 %v513, %v518
    %vm520 = vcmp.eq.s32.totalorder %v459, 0
    %vm521 = vcmp.eq.s32.totalorder %v358, 0
    %vm522 = vmand %vm520, %vm521
    %vm523 = vcmp.eq.s32.totalorder %v358, 1
    %vm524 = vmand %vm520, %vm523
    %vm525 = vcmp.eq.s32.totalorder %v358, 2
    %vm526 = vmand %vm520, %vm525
    %v527 = vsel %vm526, %v518, 0.0
    %v528 = vsel %vm524, %v513, %v527
    %v529 = vsel %vm522, %v519, %v528
    %530 = vst [vmem:[%s3] sm:$0xff] %v529
    // Predicated region
    $region14: #{contrast_loss.1} parent=1 // pred_check
      _
    $region15: #{contrast_loss.1} parent=1 // pred_check_branch
      %532 = sbr.rel (0) target = $region17
    $region16: #{contrast_loss.1} parent=1 // pred_region
      _
    $region17: #{contrast_loss.1} parent=1 // pred_fallthru
      _
    // Predicated region
    $region18: #{contrast_loss.1} parent=1 // pred_check
      _
    $region19: #{contrast_loss.1} parent=1 // pred_check_branch
      %534 = sbr.rel (0) target = $region21
    $region20: #{contrast_loss.1} parent=1 // pred_region
      _
    $region21: #{contrast_loss.1} parent=1 // pred_fallthru
      _
    %535 = vsyncpa [#allocation6], 1

</llo_original>
